<compile_context>
chip_gen: v6e
topology: v6e:2x2x1
jax: 0.10.0
libtpu: 0.0.40
codegen_flags: <defaults>
</compile_context>

<pallas_src>
import functools

import numpy as np
import jax
import jax.numpy as jnp
from jax.experimental import pallas as pl
from jax.experimental.pallas import tpu as pltpu


def _round_up(x, m):
    return (x + m - 1) // m * m


# ----------------------------- Pallas kernel --------------------------------

def _encoder_kernel(p_ref, w1_ref, b1_ref, w2_ref, b2_ref, o_ref, stk_ref,
                    *, wp, m_blk, g):
    """Fused s2d-conv3x3/s2 + bias + SiLU + conv1x1 + bias (scale pre-folded).

    p_ref : (G, CQ, tile_s)    bf16  halo'd space-to-depth plane tiles
    w1_ref: (Cmid, 4*CQ)       bf16  merged weight slab (4 shifts stacked on K)
    b1_ref: (Cmid, 1)          f32
    w2_ref: (Cz, Cmid)         bf16  (scale_factor folded in)
    b2_ref: (Cz, 1)            f32   (scale_factor folded in)
    o_ref : (G, Cz, m_blk)     f32   lane-dense latent tiles
    stk_ref:(4*CQ, G*m_blk)    bf16  VMEM scratch: stacked shifted activations
    """
    cq = p_ref.shape[1]
    # The 3x3/s2 conv over 4 even/odd planes == one (Cmid, 4CQ) x (4CQ, M)
    # matmul where the 4 K-groups are the unit shifts (si, sj) in {0,1}^2 with
    # flat offsets si*wp + sj.  All slices are static; copies are VMEM-only.
    for fi in range(g):
        for k, off in enumerate((0, 1, wp, wp + 1)):
            stk_ref[k * cq:(k + 1) * cq, fi * m_blk:(fi + 1) * m_blk] = (
                p_ref[fi, :, off:off + m_blk])
    h = jnp.dot(w1_ref[...], stk_ref[...],
                preferred_element_type=jnp.float32)          # MXU, K = 4*CQ
    h = h + b1_ref[...]
    h = h * jax.nn.sigmoid(h)                                # SiLU in f32 (EUP)
    y = jnp.dot(w2_ref[...], h.astype(jnp.bfloat16),
                preferred_element_type=jnp.float32) + b2_ref[...]
    for fi in range(g):
        o_ref[fi, :, :] = y[:, fi * m_blk:(fi + 1) * m_blk].astype(o_ref.dtype)


# ------------------------- prep + pallas_call wrapper ------------------------

def _pick_group(n_work, m_blk, max_lanes, bytes_per_item, budget, max_group=8):
    """Largest divisor of n_work to pack per grid step (prefer >=2 grid steps)."""
    cands = [gg for gg in range(1, min(n_work, max_group) + 1)
             if n_work % gg == 0
             and gg * m_blk <= max(max_lanes, m_blk)
             and gg * bytes_per_item <= budget]
    if not cands:
        return 1
    pref = [gg for gg in cands if n_work // gg >= 2]   # keep both v7x TCs busy
    return max(pref) if pref else max(cands)


def _encode_frames(vid, w1k, b1k, w2k, b2k, *, max_lanes):
    """(N, C, H, W) f32 -> (N, Cz, H//2, W//2) f32 latent (scale folded in)."""
    n, c, h, w = vid.shape
    # TODO(synk): odd H/W unsupported (reference conv pads); prep assumes even.
    assert h % 2 == 0 and w % 2 == 0, "stride-2 conv prep expects even H, W"
    ho, wo = h // 2, w // 2
    wp = wo + 1                         # +1 left zero-pad column (conv padding)
    cq = w1k.shape[1] // 4
    cmid = w1k.shape[0]
    cz = w2k.shape[0]

    # ------------------ tiling choice (pure Python on static shapes) ---------
    m_flat = ho * wp                    # flat output positions per frame
    m_blk = min(_round_up(m_flat, 128), max(128, (max_lanes // 128) * 128))
    halo_req = wp + 1                   # shifted reads need tile_s >= m_blk+wp+1

    def item_bytes(mb):                 # VMEM working set per work item
        tile = mb + _round_up(halo_req, 128)
        return (2 * cq * tile * 2       # bf16 input block, double-buffered
                + 2 * cz * mb * 4       # f32 output block, double-buffered
                + 4 * cq * mb * 2       # bf16 stacking scratch
                + 5 * cmid * mb * 4)    # f32 temporaries (h, sigmoid, silu, ...)

    budget = 20 << 20                   # per-step budget, safe on v7x (64 MiB)
    while m_blk > 128 and item_bytes(m_blk) > budget:
        m_blk = max(128, (m_blk // 2 // 128) * 128)

    n_mt = -(-m_flat // m_blk)          # spatial tiles per frame
    halo = _round_up(halo_req, 128)
    tile_s = m_blk + halo               # invariant: tile_s >= m_blk + wp + 1
    n_work = n * n_mt
    g = _pick_group(n_work, m_blk, max_lanes, item_bytes(m_blk), budget)
    num_groups = n_work // g

    # --------------- space-to-depth planes (single O(input) pass) ------------
    x = vid.astype(jnp.bfloat16)        # cast BEFORE the transpose: 2 B/elt move
    x = x.reshape(n, c, ho, 2, wo, 2)
    x = jnp.transpose(x, (0, 3, 5, 1, 2, 4)).reshape(n, 4 * c, ho, wo)
    # pad channels to a sublane multiple; +1 top/bottom row, +1 left col
    # (= conv padding and slack for the shifted reads of discarded junk slots).
    x = jnp.pad(x, ((0, 0), (0, cq - 4 * c), (1, 1), (1, 0)))
    flat = (ho + 2) * wp
    s_full = _round_up(max(flat, n_mt * m_blk + halo), 128)
    x = x.reshape(n, cq, flat)
    x = jnp.pad(x, ((0, 0), (0, 0), (0, s_full - flat)))
    # halo'd, NON-overlapping work tiles -> plain Blocked BlockSpecs suffice.
    tiles = [x[:, :, t * m_blk:t * m_blk + tile_s] for t in range(n_mt)]
    p = jnp.stack(tiles, axis=1).reshape(n_work, cq, tile_s)

    # ----------------------------- pallas_call -------------------------------
    try:
        vmem_cap = pltpu.get_tpu_info().vmem_capacity_bytes
    except Exception:
        vmem_cap = 64 << 20             # conservative default (v7x: 64 MiB/TC)
    vmem_limit = int(min(vmem_cap * 3 // 4,
                         max(32 << 20, 2 * g * item_bytes(m_blk) + (4 << 20))))

    kernel = functools.partial(_encoder_kernel, wp=wp, m_blk=m_blk, g=g)
    out = pl.pallas_call(
        kernel,
        out_shape=jax.ShapeDtypeStruct((n_work, cz, m_blk), jnp.float32),
        grid=(num_groups,),
        in_specs=[
            pl.BlockSpec((g, cq, tile_s), lambda i: (i, 0, 0)),
            pl.BlockSpec((cmid, 4 * cq), lambda i: (0, 0)),
            pl.BlockSpec((cmid, 1), lambda i: (0, 0)),
            pl.BlockSpec((cz, cmid), lambda i: (0, 0)),
            pl.BlockSpec((cz, 1), lambda i: (0, 0)),
        ],
        out_specs=pl.BlockSpec((g, cz, m_blk), lambda i: (i, 0, 0)),
        scratch_shapes=[pltpu.VMEM((4 * cq, g * m_blk), jnp.bfloat16)],
        compiler_params=pltpu.CompilerParams(
            dimension_semantics=("parallel",),
            vmem_limit_bytes=vmem_limit),
    )(p, w1k, b1k, w2k, b2k)

    # Reassemble tiles, drop the one junk lane per image row (row stride wp) and
    # the lane padding; result is already NCHW latent -> no transpose pass.
    lat = out.reshape(n, n_mt, cz, m_blk).transpose(0, 2, 1, 3)
    lat = lat.reshape(n, cz, n_mt * m_blk)[:, :, :m_flat]
    lat = lat.reshape(n, cz, ho, wp)[..., :wo]
    return lat


@functools.partial(jax.jit, static_argnames=("t", "n_copies", "max_lanes"))
def _forward(vid, w1k, b1k, w2k, b2k, *, t, n_copies, max_lanes):
    lat = _encode_frames(vid, w1k, b1k, w2k, b2k, max_lanes=max_lanes)
    bt, cz, hz, wz = lat.shape
    b = bt // t
    # rearrange '(b t) c h w -> b () (t c) h w' ; repeat 'b 1 c h w -> (b n) c h w'
    lat = lat.reshape(b, t * cz, hz, wz)
    lat = jnp.broadcast_to(lat[:, None], (b, n_copies, t * cz, hz, wz))
    return lat.reshape(b * n_copies, t * cz, hz, wz)


# --------------------------------- module ------------------------------------

class VideoPredictionEmbedderWithEncoderPallas:
    """Pallas port of VideoPredictionEmbedderWithEncoder.forward."""

    def __init__(self, n_cond_frames, n_copies, c_in=3, c_mid=32, c_z=4,
                 scale_factor=0.18215, en_and_decode_n_samples_a_time=None,
                 max_lanes_per_step=8192, seed=0):
        self.n_cond_frames = n_cond_frames
        self.n_copies = n_copies
        self.scale_factor = scale_factor
        # Kept for API parity; chunking is a no-op here because the Pallas grid
        # already iterates work groups sequentially inside one pallas_call.
        self.en_and_decode_n_samples_a_time = en_and_decode_n_samples_a_time
        self.skip_encode = False
        self.c_z = c_z
        self.max_lanes_per_step = max_lanes_per_step
        # TODO(synk): sigma_sampler_config / sigma_cond_config are None in this
        # instantiation, so the noise-augmentation branch is skipped.

        key = jax.random.PRNGKey(seed)
        k1, k2, k3, k4 = jax.random.split(key, 4)
        fan1 = 9 * c_in
        # PyTorch-style parameters (f32, used by the reference path).
        self.w_conv = (jax.random.normal(k1, (c_mid, c_in, 3, 3), jnp.float32)
                       / np.sqrt(fan1))
        self.b1 = jax.random.normal(k2, (c_mid,), jnp.float32) * 0.01
        self.w2 = (jax.random.normal(k3, (c_z, c_mid), jnp.float32)
                   / np.sqrt(c_mid))
        self.b2 = jax.random.normal(k4, (c_z,), jnp.float32) * 0.01

        # --- kernel-side reparameterization (space-to-depth weight slabs) ---
        cq = _round_up(4 * c_in, 8)
        w1t = np.zeros((2, 2, c_mid, cq), np.float32)
        wc = np.asarray(self.w_conv)
        tap = {(0, 1): 0, (1, 0): 1, (1, 1): 2}   # (shift, parity) -> dy / dx
        for (si, rp), dy in tap.items():
            for (sj, cp), dx in tap.items():
                q0 = (rp * 2 + cp) * c_in
                w1t[si, sj, :, q0:q0 + c_in] = wc[:, :, dy, dx]
        # merge the 4 shifts onto K: (Cmid, 4*CQ), K-group k = si*2 + sj
        w1k = np.transpose(w1t.reshape(4, c_mid, cq), (1, 0, 2)).reshape(
            c_mid, 4 * cq)
        self.w1k = jnp.asarray(w1k, jnp.bfloat16)
        self.b1k = jnp.asarray(self.b1).reshape(c_mid, 1)
        # scale_factor folded into the 1x1 conv; weights bf16, bias f32.
        self.w2k = jnp.asarray(self.w2 * scale_factor, jnp.bfloat16)
        self.b2k = jnp.asarray(self.b2 * scale_factor).reshape(c_z, 1)

    def __call__(self, vid):
        # vid: (B * n_cond_frames, C, H, W), NCHW like PyTorch
        if self.skip_encode:
            return vid
        return _forward(vid, self.w1k, self.b1k, self.w2k, self.b2k,
                        t=self.n_cond_frames, n_copies=self.n_copies,
                        max_lanes=self.max_lanes_per_step)


# ------------------------------ reference check ------------------------------

def _reference(module, vid):
    """Pure-JAX f32 reference straight from the PyTorch-style parameters."""
    h = jax.lax.conv_general_dilated(
        vid, module.w_conv, window_strides=(2, 2), padding=((1, 1), (1, 1)),
        dimension_numbers=("NCHW", "OIHW", "NCHW"))
    h = h + module.b1.reshape(1, -1, 1, 1)
    h = h * jax.nn.sigmoid(h)
    z = jnp.einsum("nchw,oc->nohw", h, module.w2) + module.b2.reshape(1, -1, 1, 1)
    z = z * module.scale_factor
    t = module.n_cond_frames
    n, cz, hz, wz = z.shape
    b = n // t
    z = z.reshape(b, t * cz, hz, wz)
    z = jnp.broadcast_to(z[:, None], (b, module.n_copies, t * cz, hz, wz))
    return z.reshape(b * module.n_copies, t * cz, hz, wz)


if __name__ == "__main__":
    # --- test 1: small frames, frame-packing path (G > 1, single M tile) -----
    B, T, C, H, W = 2, 2, 3, 16, 16
    n_copies = 3
    vid = jax.random.normal(jax.random.PRNGKey(0), (B * T, C, H, W), jnp.float32)
    module = VideoPredictionEmbedderWithEncoderPallas(
        n_cond_frames=T, n_copies=n_copies, c_in=C,
        c_mid=32, c_z=4, scale_factor=0.18215)
    out = jax.block_until_ready(module(vid))
    expected_shape = (B * n_copies, T * module.c_z, H // 2, W // 2)
    assert out.shape == expected_shape, (out.shape, expected_shape)
    ref = jax.block_until_ready(_reference(module, vid))
    err = float(np.max(np.abs(np.asarray(out) - np.asarray(ref))))
    assert np.allclose(np.asarray(out), np.asarray(ref),
                       rtol=2e-2, atol=2e-2), err

    # --- test 2: force spatial (M) tiling (n_mt > 1) with a tiny lane budget -
    B2, T2, H2, W2 = 1, 2, 32, 32
    vid2 = jax.random.normal(jax.random.PRNGKey(1), (B2 * T2, C, H2, W2),
                             jnp.float32)
    module2 = VideoPredictionEmbedderWithEncoderPallas(
        n_cond_frames=T2, n_copies=2, c_in=C, c_mid=32, c_z=4,
        scale_factor=0.18215, max_lanes_per_step=256)
    out2 = jax.block_until_ready(module2(vid2))
    assert out2.shape == (B2 * 2, T2 * module2.c_z, H2 // 2, W2 // 2), out2.shape
    ref2 = jax.block_until_ready(_reference(module2, vid2))
    err2 = float(np.max(np.abs(np.asarray(out2) - np.asarray(ref2))))
    assert np.allclose(np.asarray(out2), np.asarray(ref2),
                       rtol=2e-2, atol=2e-2), err2

    print("KERNEL_OK")
</pallas_src>

<mosaic_0001>
module attributes {stable_mosaic.version = 11 : i64} {
  func.func @_encoder_kernel(%arg0: i32, %arg1: memref<2x16x256xbf16, #tpu.memory_space<vmem>>, %arg2: memref<32x64xbf16, #tpu.memory_space<vmem>>, %arg3: memref<32x1xf32, #tpu.memory_space<vmem>>, %arg4: memref<4x32xbf16, #tpu.memory_space<vmem>>, %arg5: memref<4x1xf32, #tpu.memory_space<vmem>>, %arg6: memref<2x4x128xf32, #tpu.memory_space<vmem>>, %arg7: memref<64x256xbf16, #tpu.memory_space<vmem>>) attributes {dimension_semantics = [#tpu.dimension_semantics<parallel>], iteration_bounds = array<i64: 2>, scalar_prefetch = 0 : i64, scratch_operands = 1 : i64, tpu.core_type = #tpu.core_type<tc>, window_params = [{transform_indices = @transform_0, window_bounds = array<i64: 2, 16, 256>}, {pipeline_mode = #tpu.pipeline_mode<synchronous>, transform_indices = @transform_1, window_bounds = array<i64: 32, 64>}, {pipeline_mode = #tpu.pipeline_mode<synchronous>, transform_indices = @transform_2, window_bounds = array<i64: 32, 1>}, {pipeline_mode = #tpu.pipeline_mode<synchronous>, transform_indices = @transform_3, window_bounds = array<i64: 4, 32>}, {pipeline_mode = #tpu.pipeline_mode<synchronous>, transform_indices = @transform_4, window_bounds = array<i64: 4, 1>}, {transform_indices = @transform_5, window_bounds = array<i64: 2, 4, 128>}]} {
    %c0 = arith.constant 0 : index
    %c0_0 = arith.constant 0 : index
    %c0_1 = arith.constant 0 : index
    %0 = vector.load %arg1[%c0, %c0_0, %c0_1] : memref<2x16x256xbf16, #tpu.memory_space<vmem>>, vector<1x16x128xbf16>
    %1 = vector.shape_cast %0 : vector<1x16x128xbf16> to vector<16x128xbf16>
    %c0_2 = arith.constant 0 : index
    %c0_3 = arith.constant 0 : index
    %2 = vector.load %arg7[%c0_2, %c0_3] : memref<64x256xbf16, #tpu.memory_space<vmem>>, vector<16x128xbf16>
    tpu.vector_store %arg7[%c0_2, %c0_3], %1 {strides = array<i32>} : memref<64x256xbf16, #tpu.memory_space<vmem>>, vector<16x128xbf16>,
    %c0_4 = arith.constant 0 : index
    %c0_5 = arith.constant 0 : index
    %c1 = arith.constant 1 : index
    %3 = vector.load %arg1[%c0_4, %c0_5, %c1] : memref<2x16x256xbf16, #tpu.memory_space<vmem>>, vector<1x16x128xbf16>
    %4 = vector.shape_cast %3 : vector<1x16x128xbf16> to vector<16x128xbf16>
    %c16 = arith.constant 16 : index
    %c0_6 = arith.constant 0 : index
    %5 = vector.load %arg7[%c16, %c0_6] : memref<64x256xbf16, #tpu.memory_space<vmem>>, vector<16x128xbf16>
    tpu.vector_store %arg7[%c16, %c0_6], %4 {strides = array<i32>} : memref<64x256xbf16, #tpu.memory_space<vmem>>, vector<16x128xbf16>,
    %c0_7 = arith.constant 0 : index
    %c0_8 = arith.constant 0 : index
    %c9 = arith.constant 9 : index
    %6 = vector.load %arg1[%c0_7, %c0_8, %c9] : memref<2x16x256xbf16, #tpu.memory_space<vmem>>, vector<1x16x128xbf16>
    %7 = vector.shape_cast %6 : vector<1x16x128xbf16> to vector<16x128xbf16>
    %c32 = arith.constant 32 : index
    %c0_9 = arith.constant 0 : index
    %8 = vector.load %arg7[%c32, %c0_9] : memref<64x256xbf16, #tpu.memory_space<vmem>>, vector<16x128xbf16>
    tpu.vector_store %arg7[%c32, %c0_9], %7 {strides = array<i32>} : memref<64x256xbf16, #tpu.memory_space<vmem>>, vector<16x128xbf16>,
    %c0_10 = arith.constant 0 : index
    %c0_11 = arith.constant 0 : index
    %c10 = arith.constant 10 : index
    %9 = vector.load %arg1[%c0_10, %c0_11, %c10] : memref<2x16x256xbf16, #tpu.memory_space<vmem>>, vector<1x16x128xbf16>
    %10 = vector.shape_cast %9 : vector<1x16x128xbf16> to vector<16x128xbf16>
    %c48 = arith.constant 48 : index
    %c0_12 = arith.constant 0 : index
    %11 = vector.load %arg7[%c48, %c0_12] : memref<64x256xbf16, #tpu.memory_space<vmem>>, vector<16x128xbf16>
    tpu.vector_store %arg7[%c48, %c0_12], %10 {strides = array<i32>} : memref<64x256xbf16, #tpu.memory_space<vmem>>, vector<16x128xbf16>,
    %c1_13 = arith.constant 1 : index
    %c0_14 = arith.constant 0 : index
    %c0_15 = arith.constant 0 : index
    %12 = vector.load %arg1[%c1_13, %c0_14, %c0_15] : memref<2x16x256xbf16, #tpu.memory_space<vmem>>, vector<1x16x128xbf16>
    %13 = vector.shape_cast %12 : vector<1x16x128xbf16> to vector<16x128xbf16>
    %c0_16 = arith.constant 0 : index
    %c128 = arith.constant 128 : index
    %14 = vector.load %arg7[%c0_16, %c128] : memref<64x256xbf16, #tpu.memory_space<vmem>>, vector<16x128xbf16>
    tpu.vector_store %arg7[%c0_16, %c128], %13 {strides = array<i32>} : memref<64x256xbf16, #tpu.memory_space<vmem>>, vector<16x128xbf16>,
    %c1_17 = arith.constant 1 : index
    %c0_18 = arith.constant 0 : index
    %c1_19 = arith.constant 1 : index
    %15 = vector.load %arg1[%c1_17, %c0_18, %c1_19] : memref<2x16x256xbf16, #tpu.memory_space<vmem>>, vector<1x16x128xbf16>
    %16 = vector.shape_cast %15 : vector<1x16x128xbf16> to vector<16x128xbf16>
    %c16_20 = arith.constant 16 : index
    %c128_21 = arith.constant 128 : index
    %17 = vector.load %arg7[%c16_20, %c128_21] : memref<64x256xbf16, #tpu.memory_space<vmem>>, vector<16x128xbf16>
    tpu.vector_store %arg7[%c16_20, %c128_21], %16 {strides = array<i32>} : memref<64x256xbf16, #tpu.memory_space<vmem>>, vector<16x128xbf16>,
    %c1_22 = arith.constant 1 : index
    %c0_23 = arith.constant 0 : index
    %c9_24 = arith.constant 9 : index
    %18 = vector.load %arg1[%c1_22, %c0_23, %c9_24] : memref<2x16x256xbf16, #tpu.memory_space<vmem>>, vector<1x16x128xbf16>
    %19 = vector.shape_cast %18 : vector<1x16x128xbf16> to vector<16x128xbf16>
    %c32_25 = arith.constant 32 : index
    %c128_26 = arith.constant 128 : index
    %20 = vector.load %arg7[%c32_25, %c128_26] : memref<64x256xbf16, #tpu.memory_space<vmem>>, vector<16x128xbf16>
    tpu.vector_store %arg7[%c32_25, %c128_26], %19 {strides = array<i32>} : memref<64x256xbf16, #tpu.memory_space<vmem>>, vector<16x128xbf16>,
    %c1_27 = arith.constant 1 : index
    %c0_28 = arith.constant 0 : index
    %c10_29 = arith.constant 10 : index
    %21 = vector.load %arg1[%c1_27, %c0_28, %c10_29] : memref<2x16x256xbf16, #tpu.memory_space<vmem>>, vector<1x16x128xbf16>
    %22 = vector.shape_cast %21 : vector<1x16x128xbf16> to vector<16x128xbf16>
    %c48_30 = arith.constant 48 : index
    %c128_31 = arith.constant 128 : index
    %23 = vector.load %arg7[%c48_30, %c128_31] : memref<64x256xbf16, #tpu.memory_space<vmem>>, vector<16x128xbf16>
    tpu.vector_store %arg7[%c48_30, %c128_31], %22 {strides = array<i32>} : memref<64x256xbf16, #tpu.memory_space<vmem>>, vector<16x128xbf16>,
    %c0_32 = arith.constant 0 : index
    %c0_33 = arith.constant 0 : index
    %24 = vector.load %arg2[%c0_32, %c0_33] : memref<32x64xbf16, #tpu.memory_space<vmem>>, vector<32x64xbf16>
    %c0_34 = arith.constant 0 : index
    %c0_35 = arith.constant 0 : index
    %25 = vector.load %arg7[%c0_34, %c0_35] : memref<64x256xbf16, #tpu.memory_space<vmem>>, vector<64x256xbf16>
    %cst = arith.constant dense<0.000000e+00> : vector<32x256xf32>
    %26 = tpu.matmul %24, %25, %cst {dimension_numbers = #tpu.dot_dimension_numbers<[1], [0], [0], [1], [0, 0, 1, 1], [], []>} : vector<32x64xbf16>, vector<64x256xbf16>, vector<32x256xf32> -> vector<32x256xf32>
    %c0_36 = arith.constant 0 : index
    %c0_37 = arith.constant 0 : index
    %27 = vector.load %arg3[%c0_36, %c0_37] : memref<32x1xf32, #tpu.memory_space<vmem>>, vector<32x1xf32>
    %28 = vector.broadcast %27 : vector<32x1xf32> to vector<32x256xf32>
    %29 = arith.addf %26, %28 : vector<32x256xf32>
    %30 = arith.negf %29 : vector<32x256xf32>
    %31 = math.exp %30 : vector<32x256xf32>
    %cst_38 = arith.constant 1.000000e+00 : f32
    %32 = vector.broadcast %cst_38 : f32 to vector<32x256xf32>
    %33 = arith.addf %32, %31 : vector<32x256xf32>
    %34 = arith.divf %32, %33 : vector<32x256xf32>
    %35 = arith.mulf %29, %34 : vector<32x256xf32>
    %c0_39 = arith.constant 0 : index
    %c0_40 = arith.constant 0 : index
    %36 = vector.load %arg4[%c0_39, %c0_40] : memref<4x32xbf16, #tpu.memory_space<vmem>>, vector<4x32xbf16>
    %37 = arith.truncf %35 : vector<32x256xf32> to vector<32x256xbf16>
    %cst_41 = arith.constant dense<0.000000e+00> : vector<4x256xf32>
    %38 = tpu.matmul %36, %37, %cst_41 {dimension_numbers = #tpu.dot_dimension_numbers<[1], [0], [0], [1], [0, 0, 1, 1], [], []>} : vector<4x32xbf16>, vector<32x256xbf16>, vector<4x256xf32> -> vector<4x256xf32>
    %c0_42 = arith.constant 0 : index
    %c0_43 = arith.constant 0 : index
    %39 = vector.load %arg5[%c0_42, %c0_43] : memref<4x1xf32, #tpu.memory_space<vmem>>, vector<4x1xf32>
    %40 = vector.broadcast %39 : vector<4x1xf32> to vector<4x256xf32>
    %41 = arith.addf %38, %40 : vector<4x256xf32>
    %42 = vector.extract_strided_slice %41 {offsets = [0, 0], sizes = [4, 128], strides = [1, 1]} : vector<4x256xf32> to vector<4x128xf32>
    %c0_44 = arith.constant 0 : index
    %c0_45 = arith.constant 0 : index
    %c0_46 = arith.constant 0 : index
    %43 = vector.load %arg6[%c0_44, %c0_45, %c0_46] : memref<2x4x128xf32, #tpu.memory_space<vmem>>, vector<1x4x128xf32>
    %44 = vector.shape_cast %43 : vector<1x4x128xf32> to vector<4x128xf32>
    %45 = vector.shape_cast %42 : vector<4x128xf32> to vector<1x4x128xf32>
    tpu.vector_store %arg6[%c0_44, %c0_45, %c0_46], %45 {strides = array<i32>} : memref<2x4x128xf32, #tpu.memory_space<vmem>>, vector<1x4x128xf32>,
    %46 = vector.extract_strided_slice %41 {offsets = [0, 128], sizes = [4, 128], strides = [1, 1]} : vector<4x256xf32> to vector<4x128xf32>
    %c1_47 = arith.constant 1 : index
    %c0_48 = arith.constant 0 : index
    %c0_49 = arith.constant 0 : index
    %47 = vector.load %arg6[%c1_47, %c0_48, %c0_49] : memref<2x4x128xf32, #tpu.memory_space<vmem>>, vector<1x4x128xf32>
    %48 = vector.shape_cast %47 : vector<1x4x128xf32> to vector<4x128xf32>
    %49 = vector.shape_cast %46 : vector<4x128xf32> to vector<1x4x128xf32>
    tpu.vector_store %arg6[%c1_47, %c0_48, %c0_49], %49 {strides = array<i32>} : memref<2x4x128xf32, #tpu.memory_space<vmem>>, vector<1x4x128xf32>,
    return
  }
  func.func @transform_0(%arg0: i32) -> (i32, i32, i32) {
    %c0_i32 = arith.constant 0 : i32
    %c0_i32_0 = arith.constant 0 : i32
    %c0_i32_1 = arith.constant 0 : i32
    return %arg0, %c0_i32, %c0_i32_0 : i32, i32, i32
  }
  func.func @transform_1(%arg0: i32) -> (i32, i32) {
    %c0_i32 = arith.constant 0 : i32
    %c0_i32_0 = arith.constant 0 : i32
    %c0_i32_1 = arith.constant 0 : i32
    return %c0_i32, %c0_i32_0 : i32, i32
  }
  func.func @transform_2(%arg0: i32) -> (i32, i32) {
    %c0_i32 = arith.constant 0 : i32
    %c0_i32_0 = arith.constant 0 : i32
    %c0_i32_1 = arith.constant 0 : i32
    return %c0_i32, %c0_i32_0 : i32, i32
  }
  func.func @transform_3(%arg0: i32) -> (i32, i32) {
    %c0_i32 = arith.constant 0 : i32
    %c0_i32_0 = arith.constant 0 : i32
    %c0_i32_1 = arith.constant 0 : i32
    return %c0_i32, %c0_i32_0 : i32, i32
  }
  func.func @transform_4(%arg0: i32) -> (i32, i32) {
    %c0_i32 = arith.constant 0 : i32
    %c0_i32_0 = arith.constant 0 : i32
    %c0_i32_1 = arith.constant 0 : i32
    return %c0_i32, %c0_i32_0 : i32, i32
  }
  func.func @transform_5(%arg0: i32) -> (i32, i32, i32) {
    %c0_i32 = arith.constant 0 : i32
    %c0_i32_0 = arith.constant 0 : i32
    %c0_i32_1 = arith.constant 0 : i32
    return %arg0, %c0_i32, %c0_i32_0 : i32, i32, i32
  }
}

</mosaic_0001>

<llo_original>
// kernel: _forward.1
$region0: #{_forward.1}
  #allocation0 [shape = 'u32[]', space=smem, size = 0x4, offset = 0x4, fixed_abs, tag = 'smem constant byte address 0x4 - core index']
  #allocation1 [shape = 'u32[144,128]{1,0:T(1,128)}', space=vmem, size = 0x12000, scoped, tag = 'internal scratch']
  #allocation2 [shape = 'bf16[64,256]{1,0:T(8,128)(2,1)}', space=vmem, size = 0x8000, scoped, tag = 'scratch operand']
  %s0 = inlined_call_operand.vmem [shape: bf16[4,16,256], index: 0, kind: input, shape index: {}]
  %s1 = inlined_call_operand.vmem [shape: bf16[32,64], index: 1, kind: input, shape index: {}]
  %s2 = inlined_call_operand.vmem [shape: f32[32,1], index: 2, kind: input, shape index: {}]
  %s3 = inlined_call_operand.vmem [shape: bf16[4,32], index: 3, kind: input, shape index: {}]
  %s4 = inlined_call_operand.vmem [shape: f32[4,1], index: 4, kind: input, shape index: {}]
  %s5 = inlined_call_operand.vmem [shape: f32[4,4,128], index: 5, kind: output, shape index: {}]
  %s6 = sld [smem:[#allocation0]]
  $region53: #{_forward.1} parent=0
    _
  %s8 = ssub.s32 1, %s6
  %s9 = scalar_select 0, %s8, %s6
  loop: start=0, step=1, limit=4
  $region2: #{_forward.1} parent=0 // loop_pre_header
    _
  $region3: #{_forward.1} parent=0 // loop_header
    %s11 = sphi 0, %s15
    %p12 = scmp.ge.s32.totalorder %s11, 4
    %s21 = sphi 0, %s23
    %s24 = sphi 0, %s21
    %s25 = sphi 0, %s24
    %s41 = sphi 0, %s25
    %s45 = sphi 0, %s45
    %s47 = sphi 0, %s45
    %s48 = sphi 0, %s47
    %s62 = sphi 0, %s48
    %s66 = sphi 0, %s66
    %s68 = sphi 0, %s66
    %s69 = sphi 0, %s68
    %s83 = sphi 0, %s69
    %s87 = sphi 0, %s87
    %s89 = sphi 0, %s87
    %s90 = sphi 0, %s89
    %s104 = sphi 0, %s90
    %s108 = sphi 0, %s108
    %s110 = sphi 0, %s108
    %s111 = sphi 0, %s110
    %s125 = sphi 0, %s111
    %s131 = sphi 0, %s133
    %s134 = sphi 0, %s131
    %s135 = sphi 0, %s134
    %s151 = sphi 0, %s135
  $region4: #{_forward.1} parent=0 // loop_header_branch
    %14 = sbr.rel (%p12) target = $region8
  $region5: #{_forward.1} parent=0 // loop_body
    %s16 = ssub.s32 %s11, 1
    %s17 = ssub.s32 %s11, 2
    %s18 = sadd.s32 %s11, 1
    %s19 = ssub.s32 %s11, %s18
    %p20 = scmp.eq.s32.totalorder %s19, 0
    %s22 = sadd.s32 %s21, 1
    %s23 = scalar_select %p20, %s21, %s22
    %p26 = pneg %p20
    %p27 = scmp.eq.s32.totalorder %s11, 1
    %p28 = por %p26, %p27
    %p29 = scmp.ne.s32.totalorder %s21, %s24
    %p30 = scmp.eq.s32.totalorder %s11, 0
    %p31 = por %p29, %p30
    %p32 = scmp.ne.s32.totalorder %s21, %s24
    %p33 = scmp.eq.s32.totalorder %s16, 1
    %p34 = por %p32, %p33
    %p35 = scmp.ne.s32.totalorder %s24, %s25
    %p36 = scmp.eq.s32.totalorder %s16, 0
    %p37 = por %p35, %p36
    %p38 = scmp.ne.s32.totalorder %s24, %s25
    %p39 = scmp.eq.s32.totalorder %s17, 1
    %p40 = por %p38, %p39
    %p42 = scmp.ne.s32.totalorder %s25, %s41
    %p43 = scmp.eq.s32.totalorder %s17, 0
    %p44 = por %p42, %p43
    %s46 = sadd.s32 %s45, 1
    %p49 = scmp.eq.s32.totalorder %s11, 1
    %p50 = scmp.ne.s32.totalorder %s45, %s47
    %p51 = scmp.eq.s32.totalorder %s11, 0
    %p52 = por %p50, %p51
    %p53 = scmp.ne.s32.totalorder %s45, %s47
    %p54 = scmp.eq.s32.totalorder %s16, 1
    %p55 = por %p53, %p54
    %p56 = scmp.ne.s32.totalorder %s47, %s48
    %p57 = scmp.eq.s32.totalorder %s16, 0
    %p58 = por %p56, %p57
    %p59 = scmp.ne.s32.totalorder %s47, %s48
    %p60 = scmp.eq.s32.totalorder %s17, 1
    %p61 = por %p59, %p60
    %p63 = scmp.ne.s32.totalorder %s48, %s62
    %p64 = scmp.eq.s32.totalorder %s17, 0
    %p65 = por %p63, %p64
    %s67 = sadd.s32 %s66, 1
    %p70 = scmp.eq.s32.totalorder %s11, 1
    %p71 = scmp.ne.s32.totalorder %s66, %s68
    %p72 = scmp.eq.s32.totalorder %s11, 0
    %p73 = por %p71, %p72
    %p74 = scmp.ne.s32.totalorder %s66, %s68
    %p75 = scmp.eq.s32.totalorder %s16, 1
    %p76 = por %p74, %p75
    %p77 = scmp.ne.s32.totalorder %s68, %s69
    %p78 = scmp.eq.s32.totalorder %s16, 0
    %p79 = por %p77, %p78
    %p80 = scmp.ne.s32.totalorder %s68, %s69
    %p81 = scmp.eq.s32.totalorder %s17, 1
    %p82 = por %p80, %p81
    %p84 = scmp.ne.s32.totalorder %s69, %s83
    %p85 = scmp.eq.s32.totalorder %s17, 0
    %p86 = por %p84, %p85
    %s88 = sadd.s32 %s87, 1
    %p91 = scmp.eq.s32.totalorder %s11, 1
    %p92 = scmp.ne.s32.totalorder %s87, %s89
    %p93 = scmp.eq.s32.totalorder %s11, 0
    %p94 = por %p92, %p93
    %p95 = scmp.ne.s32.totalorder %s87, %s89
    %p96 = scmp.eq.s32.totalorder %s16, 1
    %p97 = por %p95, %p96
    %p98 = scmp.ne.s32.totalorder %s89, %s90
    %p99 = scmp.eq.s32.totalorder %s16, 0
    %p100 = por %p98, %p99
    %p101 = scmp.ne.s32.totalorder %s89, %s90
    %p102 = scmp.eq.s32.totalorder %s17, 1
    %p103 = por %p101, %p102
    %p105 = scmp.ne.s32.totalorder %s90, %s104
    %p106 = scmp.eq.s32.totalorder %s17, 0
    %p107 = por %p105, %p106
    %s109 = sadd.s32 %s108, 1
    %p112 = scmp.eq.s32.totalorder %s11, 1
    %p113 = scmp.ne.s32.totalorder %s108, %s110
    %p114 = scmp.eq.s32.totalorder %s11, 0
    %p115 = por %p113, %p114
    %p116 = scmp.ne.s32.totalorder %s108, %s110
    %p117 = scmp.eq.s32.totalorder %s16, 1
    %p118 = por %p116, %p117
    %p119 = scmp.ne.s32.totalorder %s110, %s111
    %p120 = scmp.eq.s32.totalorder %s16, 0
    %p121 = por %p119, %p120
    %p122 = scmp.ne.s32.totalorder %s110, %s111
    %p123 = scmp.eq.s32.totalorder %s17, 1
    %p124 = por %p122, %p123
    %p126 = scmp.ne.s32.totalorder %s111, %s125
    %p127 = scmp.eq.s32.totalorder %s17, 0
    %p128 = por %p126, %p127
    %s129 = ssub.s32 %s11, %s18
    %p130 = scmp.eq.s32.totalorder %s129, 0
    %s132 = sadd.s32 %s131, 1
    %s133 = scalar_select %p130, %s131, %s132
    %p136 = pneg %p130
    %p137 = scmp.eq.s32.totalorder %s11, 1
    %p138 = por %p136, %p137
    %p139 = scmp.ne.s32.totalorder %s131, %s134
    %p140 = scmp.eq.s32.totalorder %s11, 0
    %p141 = por %p139, %p140
    %p142 = scmp.ne.s32.totalorder %s131, %s134
    %p143 = scmp.eq.s32.totalorder %s16, 1
    %p144 = por %p142, %p143
    %p145 = scmp.ne.s32.totalorder %s134, %s135
    %p146 = scmp.eq.s32.totalorder %s16, 0
    %p147 = por %p145, %p146
    %p148 = scmp.ne.s32.totalorder %s134, %s135
    %p149 = scmp.eq.s32.totalorder %s17, 1
    %p150 = por %p148, %p149
    %p152 = scmp.ne.s32.totalorder %s135, %s151
    %p153 = scmp.eq.s32.totalorder %s17, 0
    %p154 = por %p152, %p153
    %p155 = scmp.le.s32.totalorder 1, %s11
    %p156 = scmp.lt.s32.totalorder %s11, 3
    %p157 = pnand %p155, %p156
    %p158 = pneg %p157
    // Predicated region
    $region9: #{_forward.1} parent=5 // pred_check
      _
    $region10: #{_forward.1} parent=5 // pred_check_branch
      %160 = sbr.rel (%p157) target = $region12
    $region11: #{_forward.1} parent=5 // pred_region
      %s161 = ssub.s32 %s11, 1
      // Predicated region
      $region13: #{_forward.1} parent=11 // pred_check
        %p162 = pneg %p58
      $region14: #{_forward.1} parent=11 // pred_check_branch
        %164 = sbr.rel (%p162) target = $region16
      $region15: #{_forward.1} parent=11 // pred_region
        _
      $region16: #{_forward.1} parent=11 // pred_fallthru
        _
      // Predicated region
      $region17: #{_forward.1} parent=11 // pred_check
        %p165 = pneg %p79
      $region18: #{_forward.1} parent=11 // pred_check_branch
        %167 = sbr.rel (%p165) target = $region20
      $region19: #{_forward.1} parent=11 // pred_region
        _
      $region20: #{_forward.1} parent=11 // pred_fallthru
        _
      // Predicated region
      $region21: #{_forward.1} parent=11 // pred_check
        %p168 = pneg %p100
      $region22: #{_forward.1} parent=11 // pred_check_branch
        %170 = sbr.rel (%p168) target = $region24
      $region23: #{_forward.1} parent=11 // pred_region
        _
      $region24: #{_forward.1} parent=11 // pred_fallthru
        _
      // Predicated region
      $region25: #{_forward.1} parent=11 // pred_check
        %p171 = pneg %p121
      $region26: #{_forward.1} parent=11 // pred_check_branch
        %173 = sbr.rel (%p171) target = $region28
      $region27: #{_forward.1} parent=11 // pred_region
        _
      $region28: #{_forward.1} parent=11 // pred_fallthru
        _
    $region12: #{_forward.1} parent=5 // pred_fallthru
      _
    %p174 = scmp.lt.s32.totalorder %s11, 2
    // Predicated region
    $region29: #{_forward.1} parent=5 // pred_check
      %p175 = pneg %p174
    $region30: #{_forward.1} parent=5 // pred_check_branch
      %177 = sbr.rel (%p175) target = $region32
    $region31: #{_forward.1} parent=5 // pred_region
      // Predicated region
      $region33: #{_forward.1} parent=31 // pred_check
        %p178 = pneg %p31
      $region34: #{_forward.1} parent=31 // pred_check_branch
        %180 = sbr.rel (%p178) target = $region36
      $region35: #{_forward.1} parent=31 // pred_region
        %s181 = smul.u32 2, %s11
        %p182 = scmp.lt.s32.totalorder %s181, 3
        %s183 = scalar_select %p182, %s181, 3
        %s184 = smul.addr %s183, 4
        %s185 = smul.addr %s184, 4
        %s186 = scalar_lea.vmem %s0, %s185
        %s187 = smul.u32 2, %s11
      $region36: #{_forward.1} parent=31 // pred_fallthru
        _
    $region32: #{_forward.1} parent=5 // pred_fallthru
      _
    %p188 = scmp.le.s32.totalorder 1, %s11
    %p189 = scmp.lt.s32.totalorder %s11, 3
    %p190 = pnand %p188, %p189
    %p191 = pneg %p190
    // Predicated region
    $region37: #{_forward.1} parent=5 // pred_check
      _
    $region38: #{_forward.1} parent=5 // pred_check_branch
      %193 = sbr.rel (%p190) target = $region40
    $region39: #{_forward.1} parent=5 // pred_region
      %s194 = ssub.s32 %s11, 1
      %s195 = smul.u32 2, %s16
      %p196 = scmp.lt.s32.totalorder %s195, 3
      %s197 = scalar_select %p196, %s195, 3
      %s198 = smul.addr %s197, 4
      %s199 = smul.addr %s198, 4
      %s200 = scalar_lea.vmem %s0, %s199
      %p201 = pneg %p37
      %p202 = pneg %p34
      %p203 = pneg %p58
      %p204 = pneg %p55
      %p205 = pneg %p79
      %p206 = pneg %p76
      %p207 = pneg %p100
      %p208 = pneg %p97
      %p209 = pneg %p121
      %p210 = pneg %p118
      %p211 = pneg %p147
      %p212 = pneg %p144
      %s213 = smul.u32 2, %s16
      %p214 = scmp.lt.s32.totalorder %s213, 3
      %s215 = scalar_select %p214, %s213, 3
      %s216 = smul.addr %s215, 4
      %s217 = scalar_lea.vmem %s5, %s216
      %s218 = smul.u32 2, %s16
      %p219 = scmp.lt.s32.totalorder %s218, 3
      %s220 = scalar_select %p219, %s218, 3
      %s221 = smul.addr %s220, 4
      %s222 = smul.addr %s221, 4
      %s223 = scalar_lea.vmem %s0, %s222
      %s224 = smul.u32 2, %s16
      %s225 = smul.u32 2, %s16
      %p226 = scmp.lt.s32.totalorder %s225, 3
      %s227 = scalar_select %p226, %s225, 3
      %s228 = smul.addr %s227, 4
      %s229 = scalar_lea.vmem %s5, %s228
      %s230 = smul.u32 2, %s16
      %v232 = vld [vmem:[%s223] sm:$0xf]
      %v233 = vld [vmem:[%s223 + $0x8] sm:$0xf]
      %234 = vst [vmem:[#allocation2] sm:$0xf] %v232
      %235 = vst [vmem:[#allocation2 + $0x8] sm:$0xf] %v233
      %v236 = vld [vmem:[%s223] sm:$0xff]
      %v237 = vld [vmem:[%s223 + $0x8] sm:$0xff]
      %240 = vrot.lane.b32.xlu0 %v236, 127
      %v241 = vpop.permute.xlu0 %240
      %242 = vrot.lane.b32.xlu0 %v237, 127
      %v243 = vpop.permute.xlu0 %242
      %v244 = vrot.slane %v241, 4
      %v245 = vrot.slane %v243, 4
      %vm246 = vcmask 1039360
      %v247 = vsel %vm246, %v241, %v244
      %v248 = vsel %vm246, %v243, %v245
      %251 = vst [vmem:[#allocation2 + $0x10] sm:$0xf] %v247
      %252 = vst [vmem:[#allocation2 + $0x18] sm:$0xf] %v248
      %v253 = vld [vmem:[%s223] sm:$0xff]
      %v254 = vld [vmem:[%s223 + $0x8] sm:$0xff]
      %257 = vrot.lane.b32.xlu0 %v253, 119
      %v258 = vpop.permute.xlu0 %257
      %259 = vrot.lane.b32.xlu0 %v254, 119
      %v260 = vpop.permute.xlu0 %259
      %v261 = vrot.slane %v258, 4
      %v262 = vrot.slane %v260, 4
      %vm263 = vcmask 973824
      %v264 = vsel %vm263, %v258, %v261
      %v265 = vsel %vm263, %v260, %v262
      %268 = vst [vmem:[#allocation2 + $0x20] sm:$0xf] %v264
      %269 = vst [vmem:[#allocation2 + $0x28] sm:$0xf] %v265
      %v270 = vld [vmem:[%s223] sm:$0xff]
      %v271 = vld [vmem:[%s223 + $0x8] sm:$0xff]
      %274 = vrot.lane.b32.xlu0 %v270, 118
      %v275 = vpop.permute.xlu0 %274
      %276 = vrot.lane.b32.xlu0 %v271, 118
      %v277 = vpop.permute.xlu0 %276
      %v278 = vrot.slane %v275, 4
      %v279 = vrot.slane %v277, 4
      %vm280 = vcmask 965632
      %v281 = vsel %vm280, %v275, %v278
      %v282 = vsel %vm280, %v277, %v279
      %285 = vst [vmem:[#allocation2 + $0x30] sm:$0xf] %v281
      %286 = vst [vmem:[#allocation2 + $0x38] sm:$0xf] %v282
      %s287 = scalar_lea.vmem %s223, 16
      %v288 = vld [vmem:[%s287] sm:$0xf]
      %v289 = vld [vmem:[%s287 + $0x8] sm:$0xf]
      %290 = vst [vmem:[#allocation2 + $0x4] sm:$0xf] %v288
      %291 = vst [vmem:[#allocation2 + $0xc] sm:$0xf] %v289
      %v292 = vld [vmem:[%s287] sm:$0xff]
      %v293 = vld [vmem:[%s287 + $0x8] sm:$0xff]
      %296 = vrot.lane.b32.xlu0 %v292, 127
      %v297 = vpop.permute.xlu0 %296
      %298 = vrot.lane.b32.xlu0 %v293, 127
      %v299 = vpop.permute.xlu0 %298
      %v300 = vrot.slane %v297, 4
      %v301 = vrot.slane %v299, 4
      %v302 = vsel %vm246, %v297, %v300
      %v303 = vsel %vm246, %v299, %v301
      %306 = vst [vmem:[#allocation2 + $0x14] sm:$0xf] %v302
      %307 = vst [vmem:[#allocation2 + $0x1c] sm:$0xf] %v303
      %v308 = vld [vmem:[%s287] sm:$0xff]
      %v309 = vld [vmem:[%s287 + $0x8] sm:$0xff]
      %312 = vrot.lane.b32.xlu0 %v308, 119
      %v313 = vpop.permute.xlu0 %312
      %314 = vrot.lane.b32.xlu0 %v309, 119
      %v315 = vpop.permute.xlu0 %314
      %v316 = vrot.slane %v313, 4
      %v317 = vrot.slane %v315, 4
      %v318 = vsel %vm263, %v313, %v316
      %v319 = vsel %vm263, %v315, %v317
      %322 = vst [vmem:[#allocation2 + $0x24] sm:$0xf] %v318
      %323 = vst [vmem:[#allocation2 + $0x2c] sm:$0xf] %v319
      %v324 = vld [vmem:[%s287] sm:$0xff]
      %v325 = vld [vmem:[%s287 + $0x8] sm:$0xff]
      %328 = vrot.lane.b32.xlu0 %v324, 118
      %v329 = vpop.permute.xlu0 %328
      %330 = vrot.lane.b32.xlu0 %v325, 118
      %v331 = vpop.permute.xlu0 %330
      %v332 = vrot.slane %v329, 4
      %v333 = vrot.slane %v331, 4
      %v334 = vsel %vm280, %v329, %v332
      %v335 = vsel %vm280, %v331, %v333
      %338 = vst [vmem:[#allocation2 + $0x34] sm:$0xf] %v334
      %339 = vst [vmem:[#allocation2 + $0x3c] sm:$0xf] %v335
      %v340 = vld [vmem:[%s1] sm:$0xf]
      %v341 = vld [vmem:[%s1 + $0x4] sm:$0xf]
      %v342 = vld [vmem:[%s1 + $0x8] sm:$0xf]
      %v343 = vld [vmem:[%s1 + $0xc] sm:$0xf]
      %v344 = vld [vmem:[#allocation2] sm:$0xff]
      %v345 = vld [vmem:[#allocation2 + $0x8] sm:$0xff]
      %v346 = vld [vmem:[#allocation2 + $0x10] sm:$0xff]
      %v347 = vld [vmem:[#allocation2 + $0x18] sm:$0xff]
      %v348 = vld [vmem:[#allocation2 + $0x20] sm:$0xff]
      %v349 = vld [vmem:[#allocation2 + $0x28] sm:$0xff]
      %v350 = vld [vmem:[#allocation2 + $0x30] sm:$0xff]
      %v351 = vld [vmem:[#allocation2 + $0x38] sm:$0xff]
      %v352 = vld [vmem:[%s2] sm:$0xff]
      %v353 = vld [vmem:[%s2 + $0x8] sm:$0xff]
      %v354 = vld [vmem:[%s2 + $0x10] sm:$0xff]
      %v355 = vld [vmem:[%s2 + $0x18] sm:$0xff]
      %357 = vset.pattern.permute.xlu0 0
      %358 = vperm.xlu0 %357, %v352
      %v359 = vpop.permute.xlu0 %358
      %362 = vset.pattern.permute.xlu0 0
      %363 = vperm.xlu0 %362, %v353
      %v364 = vpop.permute.xlu0 %363
      %367 = vset.pattern.permute.xlu0 0
      %368 = vperm.xlu0 %367, %v354
      %v369 = vpop.permute.xlu0 %368
      %372 = vset.pattern.permute.xlu0 0
      %373 = vperm.xlu0 %372, %v355
      %v374 = vpop.permute.xlu0 %373
      %v380 = vunpack.c.l.b16 %v340
      %v381 = vunpack.c.l.b16 %v341
      %v382 = vunpack.c.l.b16 %v342
      %v383 = vunpack.c.l.b16 %v343
      %v384 = vpack.c.b16 %v381, %v380
      %v385 = vpack.c.b16 %v383, %v382
      %v394 = vunpack.c.l.b16 %v344
      %v395 = vunpack.c.h.b16 %v344
      %v396 = vunpack.c.l.b16 %v345
      %v397 = vunpack.c.h.b16 %v345
      %v398 = vunpack.c.l.b16 %v346
      %v399 = vunpack.c.h.b16 %v346
      %v400 = vunpack.c.l.b16 %v347
      %v401 = vunpack.c.h.b16 %v347
      %v402 = vunpack.c.l.b16 %v348
      %v403 = vunpack.c.h.b16 %v348
      %v404 = vunpack.c.l.b16 %v349
      %v405 = vunpack.c.h.b16 %v349
      %v406 = vunpack.c.l.b16 %v350
      %v407 = vunpack.c.h.b16 %v350
      %v408 = vunpack.c.l.b16 %v351
      %v409 = vunpack.c.h.b16 %v351
      %v410 = vpack.c.b16 %v396, %v394
      %v411 = vpack.c.b16 %v397, %v395
      %v412 = vpack.c.b16 %v400, %v398
      %v413 = vpack.c.b16 %v401, %v399
      %v414 = vpack.c.b16 %v404, %v402
      %v415 = vpack.c.b16 %v405, %v403
      %v416 = vpack.c.b16 %v408, %v406
      %v417 = vpack.c.b16 %v409, %v407
      %vm426 = vcmask 523264
      %v428 = vsel %vm426, %v384, 0
      %v431 = vsel %vm426, %v385, 0
      %433 = vmatprep.subr.bf16.mxu0 0
      %434 = vmatpush1.bf16.msra.mxu0 0
      %435 = vmatprep.subr.bf16.mxu0 0
      %436 = vmatpush1.bf16.msra.mxu0 0
      %437 = vmatprep.subr.bf16.mxu0 0
      %438 = vmatpush1.bf16.msra.mxu0 0
      %439 = vmatprep.subr.bf16.mxu0 0
      %440 = vmatpush1.bf16.msra.mxu0 0
      %441 = vmatprep.subr.bf16.mxu0 %v417
      %442 = vmatpush1.bf16.msra.mxu0 %v416
      %443 = vmatprep.subr.bf16.mxu0 %v415
      %444 = vmatpush1.bf16.msra.mxu0 %v414
      %445 = vmatprep.subr.bf16.mxu0 %v413
      %446 = vmatpush1.bf16.msra.mxu0 %v412
      %447 = vmatprep.subr.bf16.mxu0 %v411
      %448 = vmatpush1.bf16.msra.mxu0 %v410
      %449 = vmatprep.subr.bf16.mxu0 0
      %450 = vmatpush2.bf16.msra.mxu0 0
      %451 = vmatprep.subr.bf16.mxu0 0
      %452 = vmatpush2.bf16.msra.mxu0 0
      %453 = vmatprep.subr.bf16.mxu0 0
      %454 = vmatpush2.bf16.msra.mxu0 0
      %455 = vmatprep.subr.bf16.mxu0 0
      %456 = vmatpush2.bf16.msra.mxu0 0
      %457 = vmatprep.subr.bf16.mxu0 0
      %458 = vmatpush2.bf16.msra.mxu0 0
      %459 = vmatprep.subr.bf16.mxu0 0
      %460 = vmatpush2.bf16.msra.mxu0 0
      %461 = vmatprep.subr.bf16.mxu0 0
      %462 = vmatpush2.bf16.msra.mxu0 0
      %463 = vmatprep.subr.bf16.mxu0 0
      %464 = vmatpush2.bf16.msra.mxu0 0
      %465 = vmatprep.mubr.bf16.mxu0 0
      %466 = vmatmul.mubr.bf16.gmra.mxu0 %v428
      %v467 = vpop.f32.mrf.mxu0
      %v468 = vadd.f32 %v359, %v467
      %v469 = vpop.f32.mrf.mxu0
      %v470 = vadd.f32 %v359, %v469
      %v471 = vpop.f32.mrf.mxu0
      %v472 = vadd.f32 %v364, %v471
      %v473 = vpop.f32.mrf.mxu0
      %v474 = vadd.f32 %v364, %v473
      %475 = vmatprep.mubr.bf16.mxu0 0
      %476 = vmatmul.mubr.bf16.gmra.mxu0 %v431
      %v477 = vpop.f32.mrf.mxu0
      %v478 = vadd.f32 %v369, %v477
      %v479 = vpop.f32.mrf.mxu0
      %v480 = vadd.f32 %v369, %v479
      %v481 = vpop.f32.mrf.mxu0
      %v482 = vadd.f32 %v374, %v481
      %v483 = vpop.f32.mrf.mxu0
      %v484 = vadd.f32 %v374, %v483
      %485 = vdwg.mxu0
      %v486 = vxor.u32 %v468, 2147483648
      %v487 = vxor.u32 %v470, 2147483648
      %v488 = vxor.u32 %v472, 2147483648
      %v489 = vxor.u32 %v474, 2147483648
      %v490 = vxor.u32 %v478, 2147483648
      %v491 = vxor.u32 %v480, 2147483648
      %v492 = vxor.u32 %v482, 2147483648
      %v493 = vxor.u32 %v484, 2147483648
      %v494 = vmul.f32 %v486, 1.442695
      %v495 = vpow.pop %v494
      %v496 = vmul.f32 %v487, 1.442695
      %v497 = vpow.pop %v496
      %v498 = vmul.f32 %v488, 1.442695
      %v499 = vpow.pop %v498
      %v500 = vmul.f32 %v489, 1.442695
      %v501 = vpow.pop %v500
      %v502 = vmul.f32 %v490, 1.442695
      %v503 = vpow.pop %v502
      %v504 = vmul.f32 %v491, 1.442695
      %v505 = vpow.pop %v504
      %v506 = vmul.f32 %v492, 1.442695
      %v507 = vpow.pop %v506
      %v508 = vmul.f32 %v493, 1.442695
      %v509 = vpow.pop %v508
      %v510 = vadd.f32 %v495, 1.0
      %v511 = vadd.f32 %v497, 1.0
      %v512 = vadd.f32 %v499, 1.0
      %v513 = vadd.f32 %v501, 1.0
      %v514 = vadd.f32 %v503, 1.0
      %v515 = vadd.f32 %v505, 1.0
      %v516 = vadd.f32 %v507, 1.0
      %v517 = vadd.f32 %v509, 1.0
      %v518 = vrcp.pop %v510
      %v519 = vmul.f32 1.0, %v518
      %v520 = vrcp.pop %v511
      %v521 = vmul.f32 1.0, %v520
      %v522 = vrcp.pop %v512
      %v523 = vmul.f32 1.0, %v522
      %v524 = vrcp.pop %v513
      %v525 = vmul.f32 1.0, %v524
      %v526 = vrcp.pop %v514
      %v527 = vmul.f32 1.0, %v526
      %v528 = vrcp.pop %v515
      %v529 = vmul.f32 1.0, %v528
      %v530 = vrcp.pop %v516
      %v531 = vmul.f32 1.0, %v530
      %v532 = vrcp.pop %v517
      %v533 = vmul.f32 1.0, %v532
      %v534 = vmul.f32 %v468, %v519
      %v535 = vmul.f32 %v470, %v521
      %v536 = vmul.f32 %v472, %v523
      %v537 = vmul.f32 %v474, %v525
      %v538 = vmul.f32 %v478, %v527
      %v539 = vmul.f32 %v480, %v529
      %v540 = vmul.f32 %v482, %v531
      %v541 = vmul.f32 %v484, %v533
      %v542 = vld [vmem:[%s3] sm:$0x3]
      %v543 = vpack.c.bf16 %v536, %v534
      %v544 = vpack.c.bf16 %v537, %v535
      %v545 = vpack.c.bf16 %v540, %v538
      %v546 = vpack.c.bf16 %v541, %v539
      %v547 = vld [vmem:[%s4] sm:$0xf]
      %549 = vset.pattern.permute.xlu0 0
      %550 = vperm.xlu0 %549, %v547
      %v551 = vpop.permute.xlu0 %550
      %vm553 = vcmask 261120
      %v555 = vsel %vm553, %v542, 0
      %557 = vmatprep.subr.bf16.mxu0 0
      %558 = vmatpush1.bf16.msra.mxu0 0
      %559 = vmatprep.subr.bf16.mxu0 0
      %560 = vmatpush1.bf16.msra.mxu0 0
      %561 = vmatprep.subr.bf16.mxu0 0
      %562 = vmatpush1.bf16.msra.mxu0 0
      %563 = vmatprep.subr.bf16.mxu0 0
      %564 = vmatpush1.bf16.msra.mxu0 0
      %565 = vmatprep.subr.bf16.mxu0 0
      %566 = vmatpush1.bf16.msra.mxu0 0
      %567 = vmatprep.subr.bf16.mxu0 0
      %568 = vmatpush1.bf16.msra.mxu0 0
      %569 = vmatprep.subr.bf16.mxu0 %v546
      %570 = vmatpush1.bf16.msra.mxu0 %v545
      %571 = vmatprep.subr.bf16.mxu0 %v544
      %572 = vmatpush1.bf16.msra.mxu0 %v543
      %573 = vmatprep.subr.bf16.mxu0 0
      %574 = vmatpush2.bf16.msra.mxu0 0
      %575 = vmatprep.subr.bf16.mxu0 0
      %576 = vmatpush2.bf16.msra.mxu0 0
      %577 = vmatprep.subr.bf16.mxu0 0
      %578 = vmatpush2.bf16.msra.mxu0 0
      %579 = vmatprep.subr.bf16.mxu0 0
      %580 = vmatpush2.bf16.msra.mxu0 0
      %581 = vmatprep.subr.bf16.mxu0 0
      %582 = vmatpush2.bf16.msra.mxu0 0
      %583 = vmatprep.subr.bf16.mxu0 0
      %584 = vmatpush2.bf16.msra.mxu0 0
      %585 = vmatprep.subr.bf16.mxu0 0
      %586 = vmatpush2.bf16.msra.mxu0 0
      %587 = vmatprep.subr.bf16.mxu0 0
      %588 = vmatpush2.bf16.msra.mxu0 0
      %589 = vmatprep.mubr.bf16.mxu0 0
      %590 = vmatmul.mubr.bf16.gmra.mxu0 %v555
      %v591 = vpop.f32.mrf.mxu0
      %v592 = vadd.f32 %v551, %v591
      %v593 = vpop.f32.mrf.mxu0
      %v594 = vadd.f32 %v551, %v593
      %v595 = vpop.f32.mrf.mxu0
      %v596 = vpop.f32.mrf.mxu0
      %597 = vdwg.mxu0
      %598 = vst [vmem:[%s229] sm:$0xf] %v592
      %s599 = scalar_lea.vmem %s229, 4
      %600 = vst [vmem:[%s599] sm:$0xf] %v594
      %s601 = smul.u32 2, %s16
      %p602 = scmp.lt.s32.totalorder %s601, 3
      %s603 = scalar_select %p602, %s601, 3
      %s604 = smul.addr %s603, 4
      %s605 = scalar_lea.vmem %s5, %s604
      // Predicated region
      $region41: #{_forward.1} parent=39 // pred_check
        %p606 = pneg %p144
      $region42: #{_forward.1} parent=39 // pred_check_branch
        %608 = sbr.rel (%p606) target = $region44
      $region43: #{_forward.1} parent=39 // pred_region
        %s609 = smul.u32 2, %s16
      $region44: #{_forward.1} parent=39 // pred_fallthru
        _
    $region40: #{_forward.1} parent=5 // pred_fallthru
      _
    %p610 = scmp.le.s32.totalorder 2, %s11
    // Predicated region
    $region45: #{_forward.1} parent=5 // pred_check
      %p611 = pneg %p610
    $region46: #{_forward.1} parent=5 // pred_check_branch
      %613 = sbr.rel (%p611) target = $region48
    $region47: #{_forward.1} parent=5 // pred_region
      %s614 = ssub.s32 %s11, 2
      // Predicated region
      $region49: #{_forward.1} parent=47 // pred_check
        %p615 = pneg %p150
      $region50: #{_forward.1} parent=47 // pred_check_branch
        %617 = sbr.rel (%p615) target = $region52
      $region51: #{_forward.1} parent=47 // pred_region
        %s618 = smul.u32 2, %s17
        %p619 = scmp.lt.s32.totalorder %s618, 3
        %s620 = scalar_select %p619, %s618, 3
        %s621 = smul.addr %s620, 4
        %s622 = scalar_lea.vmem %s5, %s621
      $region52: #{_forward.1} parent=47 // pred_fallthru
        _
    $region48: #{_forward.1} parent=5 // pred_fallthru
      _
  $region6: #{_forward.1} parent=0 // loop_footer
    %s15 = sadd.s32 1, %s11
  $region7: #{_forward.1} parent=0 // loop_footer_branch
    %10 = sbr.rel target = $region3
  $region8: #{_forward.1} parent=0 // loop_exit
    _

</llo_original>
